<compile_context>
chip_gen: v5e
topology: v5e:2x2
jax: 0.10.0
libtpu: 0.0.40
codegen_flags: <defaults>
</compile_context>

<pallas_src>
import jax
import jax.numpy as jnp
from jax.experimental import pallas as pl
from jax.experimental.pallas import tpu as pltpu


def _add_kernel(x_ref, y_ref, o_ref):
    # Elementwise residual add on the current VMEM tile / full-array block.
    o_ref[...] = x_ref[...] + y_ref[...]


_LANE = 128
# Per-buffer VMEM tile budget (bytes) for the tiled (large-input) path.
# 3 arrays x 2 pipeline buffers x 2 MiB = 12 MiB < 16 MiB v5e scoped default.
_TILE_BYTES = 2 * 1024 * 1024


def _sublane_multiple(dtype) -> int:
    """Minimum sublane multiple per dtype (packed sub-32-bit dtypes need more rows)."""
    itemsize = jnp.dtype(dtype).itemsize
    return {4: 8, 2: 16, 1: 32}.get(itemsize, 8)


def quantizable_add(x: jax.Array, y: jax.Array, *, donate_x: bool = False) -> jax.Array:
    """Elementwise x + y (FloatFunctional.add semantics, float path)."""
    assert x.shape == y.shape, "QuantizableAdd expects same-shaped tensors"
    assert x.dtype == y.dtype, "QuantizableAdd expects same-dtype tensors"

    orig_shape = x.shape
    dtype = x.dtype
    itemsize = jnp.dtype(dtype).itemsize
    total = x.size

    xf = x.reshape(-1)
    yf = y.reshape(-1)

    # Pad only to a multiple of the 128-lane width, and only when strictly required.
    padded_total = pl.cdiv(total, _LANE) * _LANE
    if padded_total != total:
        pad = padded_total - total
        xf = jnp.concatenate([xf, jnp.zeros((pad,), dtype)])
        yf = jnp.concatenate([yf, jnp.zeros((pad,), dtype)])

    # Lane-dense last dim: largest multiple of 128 (<= 1024) that divides the flat size.
    lane_w = _LANE
    for cand in (1024, 512, 256):
        if padded_total % cand == 0:
            lane_w = cand
            break
    rows = padded_total // lane_w
    x2 = xf.reshape(rows, lane_w)
    y2 = yf.reshape(rows, lane_w)

    alias = {0: 0} if donate_x else {}
    total_bytes = padded_total * itemsize

    if total_bytes <= _TILE_BYTES:
        # Tiny / small case: one full-array block resident in VMEM, no grid at all.
        out2 = pl.pallas_call(
            _add_kernel,
            out_shape=jax.ShapeDtypeStruct((rows, lane_w), dtype),
            in_specs=[
                pl.BlockSpec(memory_space=pltpu.MemorySpace.VMEM),
                pl.BlockSpec(memory_space=pltpu.MemorySpace.VMEM),
            ],
            out_specs=pl.BlockSpec(memory_space=pltpu.MemorySpace.VMEM),
            input_output_aliases=alias,
        )(x2, y2)
    else:
        # Large mem-bound case: big lane-dense row tiles, double-buffered by Pallas.
        sub = _sublane_multiple(dtype)
        tile_rows = max(sub, (_TILE_BYTES // (lane_w * itemsize)) // sub * sub)
        grid = (pl.cdiv(rows, tile_rows),)
        spec = pl.BlockSpec((tile_rows, lane_w), lambda i: (i, 0))
        out2 = pl.pallas_call(
            _add_kernel,
            out_shape=jax.ShapeDtypeStruct((rows, lane_w), dtype),
            grid=grid,
            in_specs=[spec, spec],
            out_specs=spec,
            input_output_aliases=alias,
            compiler_params=pltpu.CompilerParams(
                dimension_semantics=("parallel",),
            ),
        )(x2, y2)

    out_flat = out2.reshape(-1)
    if padded_total != total:
        out_flat = out_flat[:total]
    return out_flat.reshape(orig_shape)


if __name__ == "__main__":
    key = jax.random.PRNGKey(0)
    kx, ky = jax.random.split(key)
    # NCHW residual tensors: batch=2, channels=4, spatial=16x16
    x = jax.random.normal(kx, (2, 4, 16, 16), dtype=jnp.float32)
    y = jax.random.normal(ky, (2, 4, 16, 16), dtype=jnp.float32)

    out = quantizable_add(x, y)
    jax.block_until_ready(out)

    # Correctness check against plain JAX reference.
    ref = x + y
    assert out.shape == ref.shape
    assert jnp.allclose(out, ref, atol=1e-6), "mismatch vs reference add"

    print("KERNEL_OK")
</pallas_src>

<mosaic_0001>
module attributes {stable_mosaic.version = 11 : i64} {
  func.func @_add_kernel(%arg0: memref<2x1024xf32, #tpu.memory_space<vmem>>, %arg1: memref<2x1024xf32, #tpu.memory_space<vmem>>, %arg2: memref<2x1024xf32, #tpu.memory_space<vmem>>) attributes {dimension_semantics = [], scalar_prefetch = 0 : i64, scratch_operands = 0 : i64, tpu.core_type = #tpu.core_type<tc>} {
    %c0 = arith.constant 0 : index
    %c0_0 = arith.constant 0 : index
    %0 = vector.load %arg0[%c0, %c0_0] : memref<2x1024xf32, #tpu.memory_space<vmem>>, vector<2x1024xf32>
    %c0_1 = arith.constant 0 : index
    %c0_2 = arith.constant 0 : index
    %1 = vector.load %arg1[%c0_1, %c0_2] : memref<2x1024xf32, #tpu.memory_space<vmem>>, vector<2x1024xf32>
    %2 = arith.addf %0, %1 : vector<2x1024xf32>
    %c0_3 = arith.constant 0 : index
    %c0_4 = arith.constant 0 : index
    %3 = vector.load %arg2[%c0_3, %c0_4] : memref<2x1024xf32, #tpu.memory_space<vmem>>, vector<2x1024xf32>
    tpu.vector_store %arg2[%c0_3, %c0_4], %2 {strides = array<i32>} : memref<2x1024xf32, #tpu.memory_space<vmem>>, vector<2x1024xf32>,
    return
  }
}

</mosaic_0001>

<llo_original>
// kernel: tpu_custom_call.1
$region0: #{tpu_custom_call.1}
  #allocation0 [shape = 'u32[]', space=smem, size = 0x4, offset = 0x4, fixed_abs, tag = 'smem constant byte address 0x4 - core index']
  #allocation1 [shape = 'u32[72,128]{1,0:T(1,128)}', space=vmem, size = 0x9000, scoped, tag = 'internal scratch']
  %s0 = inlined_call_operand.hbm [shape: f32[2,1024], index: 0, kind: input, shape index: {}]
  %s1 = inlined_call_operand.hbm [shape: f32[2,1024], index: 1, kind: input, shape index: {}]
  %s2 = inlined_call_operand.hbm [shape: f32[2,1024], index: 2, kind: output, shape index: {}]
  %s3 = sld [smem:[#allocation0]]
  $region26: #{tpu_custom_call.1} parent=0
    _
  %s5 = ssub.s32 1, %s3
  %s6 = scalar_select 0, %s5, %s3
  $region1: #{tpu_custom_call.1} parent=0
    #allocation2 [shape = 'u8[8192]{0}', space=vmem, size = 0x2000, scoped, tag = 'input window, operand 0, single buffered']
    #allocation3 [shape = 's32[1]{0}', space=sflag, size = 0x4, scoped, tag = 'scoped memory for tpu_custom_call.1']
    #allocation4 [shape = 's32[1]{0}', space=sflag, size = 0x4, scoped, tag = 'scoped memory for tpu_custom_call.1']
    #allocation5 [shape = 'u8[8192]{0}', space=vmem, size = 0x2000, scoped, tag = 'input window, operand 1, single buffered']
    #allocation6 [shape = 's32[1]{0}', space=sflag, size = 0x4, scoped, tag = 'scoped memory for tpu_custom_call.1']
    #allocation7 [shape = 'u8[8192]{0}', space=vmem, size = 0x2000, scoped, tag = 'output window, operand 0, single buffered']
    %7 = vsyncpa [#allocation3], 0
    %8 = vsyncpa [#allocation6], 0
    %9 = vsyncpa [#allocation4], 0
    // Predicated region
    $region2: #{tpu_custom_call.1} parent=1 // pred_check
      _
    $region3: #{tpu_custom_call.1} parent=1 // pred_check_branch
      %11 = sbr.rel (0) target = $region5
    $region4: #{tpu_custom_call.1} parent=1 // pred_region
      %13 = vsyncadd [#allocation3], 0
      %s15 = sshll.u32 %s0, 4
      %s16 = int_to_ptr.hbm [resolvable:$true] %s15
      %s17 = sshll.u32 [#allocation2], 4
      %s18 = int_to_ptr.vmem [resolvable:$true] %s17
      %20 = dma.hbm_to_vmem [thread:$0]  %s16, 256, %s18, [#allocation3]
    $region5: #{tpu_custom_call.1} parent=1 // pred_fallthru
      _
    // Predicated region
    $region6: #{tpu_custom_call.1} parent=1 // pred_check
      _
    $region7: #{tpu_custom_call.1} parent=1 // pred_check_branch
      %22 = sbr.rel (0) target = $region9
    $region8: #{tpu_custom_call.1} parent=1 // pred_region
      %24 = vsyncadd [#allocation6], 0
      %s26 = sshll.u32 %s1, 4
      %s27 = int_to_ptr.hbm [resolvable:$true] %s26
      %s28 = sshll.u32 [#allocation5], 4
      %s29 = int_to_ptr.vmem [resolvable:$true] %s28
      %31 = dma.hbm_to_vmem [thread:$0]  %s27, 256, %s29, [#allocation6]
    $region9: #{tpu_custom_call.1} parent=1 // pred_fallthru
      _
    // Predicated region
    $region10: #{tpu_custom_call.1} parent=1 // pred_check
      _
    $region11: #{tpu_custom_call.1} parent=1 // pred_check_branch
      %33 = sbr.rel (0) target = $region13
    $region12: #{tpu_custom_call.1} parent=1 // pred_region
      %35 = dma.done [#allocation3], 256
    $region13: #{tpu_custom_call.1} parent=1 // pred_fallthru
      _
    // Predicated region
    $region14: #{tpu_custom_call.1} parent=1 // pred_check
      _
    $region15: #{tpu_custom_call.1} parent=1 // pred_check_branch
      %37 = sbr.rel (0) target = $region17
    $region16: #{tpu_custom_call.1} parent=1 // pred_region
      %39 = dma.done [#allocation6], 256
    $region17: #{tpu_custom_call.1} parent=1 // pred_fallthru
      _
    %v40 = vld [vmem:[#allocation2] sm:$0xff]
    %v41 = vld [vmem:[#allocation2 + $0x8] sm:$0xff]
    %v42 = vld [vmem:[#allocation5] sm:$0xff]
    %v43 = vld [vmem:[#allocation5 + $0x8] sm:$0xff]
    %v44 = vadd.f32 %v40, %v42
    %v45 = vadd.f32 %v41, %v43
    %46 = vst [vmem:[#allocation7] sm:$0xff] %v44
    %47 = vst [vmem:[#allocation7 + $0x8] sm:$0xff] %v45
    // Predicated region
    $region18: #{tpu_custom_call.1} parent=1 // pred_check
      _
    $region19: #{tpu_custom_call.1} parent=1 // pred_check_branch
      %49 = sbr.rel (0) target = $region21
    $region20: #{tpu_custom_call.1} parent=1 // pred_region
      %51 = vsyncadd [#allocation4], 0
      %s53 = sshll.u32 [#allocation7], 4
      %s54 = int_to_ptr.vmem [resolvable:$true] %s53
      %s55 = sshll.u32 %s2, 4
      %s56 = int_to_ptr.hbm [resolvable:$true] %s55
      %58 = dma.vmem_to_hbm [thread:$0]  %s54, 256, %s56, [#allocation4]
    $region21: #{tpu_custom_call.1} parent=1 // pred_fallthru
      _
    // Predicated region
    $region22: #{tpu_custom_call.1} parent=1 // pred_check
      _
    $region23: #{tpu_custom_call.1} parent=1 // pred_check_branch
      %60 = sbr.rel (0) target = $region25
    $region24: #{tpu_custom_call.1} parent=1 // pred_region
      %62 = dma.done [#allocation4], 256
    $region25: #{tpu_custom_call.1} parent=1 // pred_fallthru
      _
    %63 = vsyncpa [#allocation3], 1
    %64 = vsyncpa [#allocation6], 1
    %65 = vsyncpa [#allocation4], 1

</llo_original>
